<compile_context>
chip_gen: v7x
topology: tpu7x:2x2x1
jax: 0.10.0
libtpu: 0.0.40
codegen_flags: <defaults>
</compile_context>

<pallas_src>
import jax
import jax.numpy as jnp
from jax import lax
from jax.experimental import pallas as pl
from jax.experimental.pallas import tpu as pltpu


# ---------------------------------------------------------------------------
# Kernel 1: per-timestep projection  out[t] = x[t] @ W + b
# Used for (a) the LSTM input projection and (b) the FC output projection.
# Fully parallel over the time axis -> pipelines freely, keeps MXU work off
# the serial recurrence.  For production vocab sizes the V axis of the FC
# would additionally be tiled with a parallel grid dim (VMEM budget on v7x).
# ---------------------------------------------------------------------------
def proj_bias_kernel(x_ref, w_ref, b_ref, o_ref):
    o_ref[0] = (jnp.dot(x_ref[0], w_ref[...],
                        preferred_element_type=jnp.float32)
                + b_ref[...]).astype(o_ref.dtype)


def batched_proj(x, w, b, out_dtype=jnp.float32):
    """x: (S, B, K), w: (K, N), b: (1, N) -> (S, B, N)."""
    S, B, K = x.shape
    N = w.shape[1]
    return pl.pallas_call(
        proj_bias_kernel,
        out_shape=jax.ShapeDtypeStruct((S, B, N), out_dtype),
        grid_spec=pltpu.PrefetchScalarGridSpec(
            num_scalar_prefetch=0,
            grid=(S,),
            in_specs=[
                pl.BlockSpec((1, B, K), lambda t: (t, 0, 0)),
                pl.BlockSpec((K, N), lambda t: (0, 0)),
                pl.BlockSpec((1, N), lambda t: (0, 0)),
            ],
            out_specs=pl.BlockSpec((1, B, N), lambda t: (t, 0, 0)),
        ),
        compiler_params=pltpu.CompilerParams(
            dimension_semantics=("parallel",)),
    )(x, w, b)


# ---------------------------------------------------------------------------
# Kernel 2: the serial LSTM recurrence, a single pallas_call invocation.
# gates_x already holds x_t @ W_ih^T + (b_ih + b_hh) in gate order [i, f, o, g];
# each step only adds h_prev @ W_hh^T and does the element-wise cell update.
# The S-step loop is unrolled in-kernel (no per-timestep grid overhead), h/c
# are carried as loop values, and hidden states land in an (S, B, H) VMEM slab.
# ---------------------------------------------------------------------------
def lstm_recurrence_kernel(gx_ref, h0_ref, c0_ref, whh_ref,
                           hseq_ref, ht_ref, ct_ref):
    S = gx_ref.shape[0]
    H = h0_ref.shape[-1]

    def step(t, carry):
        h_prev, c_prev = carry
        gates = gx_ref[t] + jnp.dot(h_prev, whh_ref[...],
                                    preferred_element_type=jnp.float32)
        # gate order [i, f, o, g]: one contiguous sigmoid over 3H lanes,
        # one tanh over the last H lanes.
        sig = jax.nn.sigmoid(gates[:, 0:3 * H])
        g = jnp.tanh(gates[:, 3 * H:4 * H])
        i = sig[:, 0:H]
        f = sig[:, H:2 * H]
        o = sig[:, 2 * H:3 * H]
        c_new = f * c_prev + i * g
        h_new = o * jnp.tanh(c_new)
        hseq_ref[t] = h_new.astype(hseq_ref.dtype)
        return (h_new, c_new)

    h_last, c_last = lax.fori_loop(0, S, step,
                                   (h0_ref[0], c0_ref[0]), unroll=True)
    ht_ref[0] = h_last
    ct_ref[0] = c_last


def textrnn_forward(tokens, hidden, params):
    """tokens: (S, B, 1) int32, hidden: ((1,B,H), (1,B,H)) float32."""
    h0, c0 = hidden
    emb = params["embedding"]           # (V, E)
    w_ih = params["w_ih"]               # (4H, E), gate order [i, f, g, o]
    w_hh = params["w_hh"]               # (4H, H)
    b_ih = params["b_ih"]               # (4H,)
    b_hh = params["b_hh"]               # (4H,)
    fc_w = params["fc_w"]               # (V, H)
    fc_b = params["fc_b"]               # (V,)

    S, B, _ = tokens.shape
    V, E = emb.shape
    H = h0.shape[-1]

    # Permute PyTorch gate order [i, f, g, o] -> [i, f, o, g] so the kernel's
    # nonlinearities act on contiguous lane slices.
    perm = jnp.concatenate([
        jnp.arange(0 * H, 1 * H),       # i
        jnp.arange(1 * H, 2 * H),       # f
        jnp.arange(3 * H, 4 * H),       # o
        jnp.arange(2 * H, 3 * H),       # g
    ])

    # glue: embedding gather + squeeze(2) done in XLA.
    # TODO(synk): the embedding gather could be moved into a Pallas kernel with
    # scalar-prefetch + pl.Element row gather; kept in glue here.
    x_emb = emb.astype(jnp.bfloat16)[tokens[..., 0]]           # (S, B, E) bf16

    wih_t = w_ih[perm].T.astype(jnp.bfloat16)                  # (E, 4H) bf16
    bias = ((b_ih + b_hh)[perm])[None, :].astype(jnp.float32)  # (1, 4H) f32
    whh_t = w_hh[perm].T.astype(jnp.float32)                   # (H, 4H) f32 (serial path)
    fcw_t = fc_w.T.astype(jnp.bfloat16)                        # (H, V) bf16
    fcb = fc_b[None, :].astype(jnp.float32)                    # (1, V) f32

    # (a) batched input projection, parallel over time.
    gates_x = batched_proj(x_emb, wih_t, bias, jnp.float32)    # (S, B, 4H)

    # (b) serial recurrence, single invocation, everything resident in VMEM.
    hseq, ht, ct = pl.pallas_call(
        lstm_recurrence_kernel,
        out_shape=(
            jax.ShapeDtypeStruct((S, B, H), jnp.bfloat16),     # hidden sequence
            jax.ShapeDtypeStruct((1, B, H), jnp.float32),      # h_T
            jax.ShapeDtypeStruct((1, B, H), jnp.float32),      # c_T
        ),
    )(gates_x, h0.astype(jnp.float32), c0.astype(jnp.float32), whh_t)

    # Dropout(p=0.2) is identity in eval/inference mode.
    # TODO(synk): training-mode dropout would use pltpu.prng_seed / prng_random_bits.

    # (c) batched FC projection, parallel over time.
    logits = batched_proj(hseq, fcw_t, fcb, jnp.float32)       # (S, B, V)

    return logits, (ht, ct)


def textrnn_reference(tokens, hidden, params):
    """Pure-JAX f32 reference mirroring PyTorch semantics (eval mode)."""
    h0, c0 = hidden
    emb = params["embedding"]
    H = h0.shape[-1]
    x_emb = emb[tokens[..., 0]]                       # (S, B, E)
    wih_t, whh_t = params["w_ih"].T, params["w_hh"].T
    bias = params["b_ih"] + params["b_hh"]

    def step(carry, x_t):
        h, c = carry
        gates = x_t @ wih_t + h @ whh_t + bias
        i = jax.nn.sigmoid(gates[:, 0:H])
        f = jax.nn.sigmoid(gates[:, H:2 * H])
        g = jnp.tanh(gates[:, 2 * H:3 * H])
        o = jax.nn.sigmoid(gates[:, 3 * H:4 * H])
        c_new = f * c + i * g
        h_new = o * jnp.tanh(c_new)
        return (h_new, c_new), h_new

    (hT, cT), outs = jax.lax.scan(step, (h0[0], c0[0]), x_emb)
    logits = outs @ params["fc_w"].T + params["fc_b"]
    return logits, (hT[None], cT[None])


if __name__ == "__main__":
    # Small shapes consistent with the module.
    INPUT_SIZE = 64      # vocab size V
    HIDDEN = 32          # H
    EMBED = 16           # E
    SEQ = 8              # S
    BATCH = 2            # B

    key = jax.random.PRNGKey(0)
    k_emb, k_wih, k_whh, k_bih, k_bhh, k_fcw, k_fcb, k_tok = jax.random.split(key, 8)

    params = {
        "embedding": jax.random.normal(k_emb, (INPUT_SIZE, EMBED), jnp.float32) * 0.1,
        "w_ih": jax.random.normal(k_wih, (4 * HIDDEN, EMBED), jnp.float32) * 0.1,
        "w_hh": jax.random.normal(k_whh, (4 * HIDDEN, HIDDEN), jnp.float32) * 0.1,
        "b_ih": jax.random.normal(k_bih, (4 * HIDDEN,), jnp.float32) * 0.1,
        "b_hh": jax.random.normal(k_bhh, (4 * HIDDEN,), jnp.float32) * 0.1,
        "fc_w": jax.random.normal(k_fcw, (INPUT_SIZE, HIDDEN), jnp.float32) * 0.1,
        "fc_b": jax.random.normal(k_fcb, (INPUT_SIZE,), jnp.float32) * 0.1,
    }

    tokens = jax.random.randint(k_tok, (SEQ, BATCH, 1), 0, INPUT_SIZE, jnp.int32)
    hidden = (jnp.zeros((1, BATCH, HIDDEN), jnp.float32),
              jnp.zeros((1, BATCH, HIDDEN), jnp.float32))

    logits, (ht, ct) = textrnn_forward(tokens, hidden, params)
    jax.block_until_ready((logits, ht, ct))

    ref_logits, (ref_ht, ref_ct) = textrnn_reference(tokens, hidden, params)
    assert logits.shape == (SEQ, BATCH, INPUT_SIZE)
    assert ht.shape == (1, BATCH, HIDDEN) and ct.shape == (1, BATCH, HIDDEN)
    # Tolerances relaxed for bf16 matmul inputs (f32 accumulation).
    assert jnp.allclose(logits, ref_logits, atol=2e-2, rtol=2e-2)
    assert jnp.allclose(ht, ref_ht, atol=2e-2, rtol=2e-2)
    assert jnp.allclose(ct, ref_ct, atol=2e-2, rtol=2e-2)

    print("KERNEL_OK")
</pallas_src>

<mosaic_0001>
module attributes {stable_mosaic.version = 11 : i64} {
  func.func @proj_bias_kernel(%arg0: i32, %arg1: memref<1x2x16xbf16, #tpu.memory_space<vmem>>, %arg2: memref<16x128xbf16, #tpu.memory_space<vmem>>, %arg3: memref<1x128xf32, #tpu.memory_space<vmem>>, %arg4: memref<1x2x128xf32, #tpu.memory_space<vmem>>) attributes {dimension_semantics = [#tpu.dimension_semantics<parallel>], iteration_bounds = array<i64: 8>, scalar_prefetch = 0 : i64, scratch_operands = 0 : i64, tpu.core_type = #tpu.core_type<tc>, window_params = [{transform_indices = @transform_0, window_bounds = array<i64: 1, 2, 16>}, {pipeline_mode = #tpu.pipeline_mode<synchronous>, transform_indices = @transform_1, window_bounds = array<i64: 16, 128>}, {pipeline_mode = #tpu.pipeline_mode<synchronous>, transform_indices = @transform_2, window_bounds = array<i64: 1, 128>}, {transform_indices = @transform_3, window_bounds = array<i64: 1, 2, 128>}]} {
    %c0 = arith.constant 0 : index
    %c0_0 = arith.constant 0 : index
    %c0_1 = arith.constant 0 : index
    %0 = vector.load %arg1[%c0, %c0_0, %c0_1] : memref<1x2x16xbf16, #tpu.memory_space<vmem>>, vector<1x2x16xbf16>
    %1 = vector.shape_cast %0 : vector<1x2x16xbf16> to vector<2x16xbf16>
    %c0_2 = arith.constant 0 : index
    %c0_3 = arith.constant 0 : index
    %2 = vector.load %arg2[%c0_2, %c0_3] : memref<16x128xbf16, #tpu.memory_space<vmem>>, vector<16x128xbf16>
    %cst = arith.constant dense<0.000000e+00> : vector<2x128xf32>
    %3 = tpu.matmul %1, %2, %cst {dimension_numbers = #tpu.dot_dimension_numbers<[1], [0], [0], [1], [0, 0, 1, 1], [], []>} : vector<2x16xbf16>, vector<16x128xbf16>, vector<2x128xf32> -> vector<2x128xf32>
    %c0_4 = arith.constant 0 : index
    %c0_5 = arith.constant 0 : index
    %4 = vector.load %arg3[%c0_4, %c0_5] : memref<1x128xf32, #tpu.memory_space<vmem>>, vector<1x128xf32>
    %5 = vector.broadcast %4 : vector<1x128xf32> to vector<2x128xf32>
    %6 = arith.addf %3, %5 : vector<2x128xf32>
    %c0_6 = arith.constant 0 : index
    %c0_7 = arith.constant 0 : index
    %c0_8 = arith.constant 0 : index
    %7 = vector.load %arg4[%c0_6, %c0_7, %c0_8] : memref<1x2x128xf32, #tpu.memory_space<vmem>>, vector<1x2x128xf32>
    %8 = vector.shape_cast %7 : vector<1x2x128xf32> to vector<2x128xf32>
    %9 = vector.shape_cast %6 : vector<2x128xf32> to vector<1x2x128xf32>
    tpu.vector_store %arg4[%c0_6, %c0_7, %c0_8], %9 {strides = array<i32>} : memref<1x2x128xf32, #tpu.memory_space<vmem>>, vector<1x2x128xf32>,
    return
  }
  func.func @transform_0(%arg0: i32) -> (i32, i32, i32) {
    %c0_i32 = arith.constant 0 : i32
    %c0_i32_0 = arith.constant 0 : i32
    %c0_i32_1 = arith.constant 0 : i32
    return %arg0, %c0_i32, %c0_i32_0 : i32, i32, i32
  }
  func.func @transform_1(%arg0: i32) -> (i32, i32) {
    %c0_i32 = arith.constant 0 : i32
    %c0_i32_0 = arith.constant 0 : i32
    %c0_i32_1 = arith.constant 0 : i32
    return %c0_i32, %c0_i32_0 : i32, i32
  }
  func.func @transform_2(%arg0: i32) -> (i32, i32) {
    %c0_i32 = arith.constant 0 : i32
    %c0_i32_0 = arith.constant 0 : i32
    %c0_i32_1 = arith.constant 0 : i32
    return %c0_i32, %c0_i32_0 : i32, i32
  }
  func.func @transform_3(%arg0: i32) -> (i32, i32, i32) {
    %c0_i32 = arith.constant 0 : i32
    %c0_i32_0 = arith.constant 0 : i32
    %c0_i32_1 = arith.constant 0 : i32
    return %arg0, %c0_i32, %c0_i32_0 : i32, i32, i32
  }
}

</mosaic_0001>

<llo_original>
// kernel: tpu_custom_call.1
$region0: #{tpu_custom_call.1}
  #allocation0 [shape = 'u32[]', space=smem, size = 0x4, offset = 0x4, fixed_abs, tag = 'smem constant byte address 0x4 - core index']
  #allocation1 [shape = 'u32[144,128]{1,0:T(1,128)}', space=vmem, size = 0x12000, scoped, tag = 'internal scratch']
  %s0 = inlined_call_operand.hbm [shape: bf16[8,2,16], index: 0, kind: input, shape index: {}]
  %s1 = inlined_call_operand.hbm [shape: bf16[16,128], index: 1, kind: input, shape index: {}]
  %s2 = inlined_call_operand.vmem [shape: f32[1,128], index: 2, kind: input, shape index: {}]
  %s3 = inlined_call_operand.hbm [shape: f32[8,2,128], index: 3, kind: output, shape index: {}]
  %s4 = sld [smem:[#allocation0]]
  $region53: #{tpu_custom_call.1} parent=0
    _
  %s6 = ssub.s32 1, %s4
  %s7 = scalar_select 0, %s6, %s4
  $region1: #{tpu_custom_call.1} parent=0
    #allocation2 [shape = 'u8[1024]{0}', space=vmem, size = 0x400, scoped, tag = 'input window, operand 0']
    #allocation3 [shape = 's32[2]{0}', space=sflag, size = 0x8, scoped, tag = 'scoped memory for tpu_custom_call.1']
    #allocation4 [shape = 's32[2]{0}', space=sflag, size = 0x8, scoped, tag = 'scoped memory for tpu_custom_call.1']
    #allocation5 [shape = 'u8[4096]{0}', space=vmem, size = 0x1000, scoped, tag = 'input window, operand 1, single buffered']
    #allocation6 [shape = 's32[1]{0}', space=sflag, size = 0x4, scoped, tag = 'scoped memory for tpu_custom_call.1']
    #allocation7 [shape = 'u8[2048]{0}', space=vmem, size = 0x800, scoped, tag = 'output window, operand 0']
    %8 = vsyncpa [#allocation3], 0
    %s9 = scalar_lea.sflag [#allocation3], 1
    %10 = vsyncpa %s9, 0
    %11 = vsyncpa [#allocation6], 0
    %12 = vsyncpa [#allocation4], 0
    %s13 = scalar_lea.sflag [#allocation4], 1
    %14 = vsyncpa %s13, 0
    loop: start=0, step=1, limit=10
    $region2: #{tpu_custom_call.1} parent=1 // loop_pre_header
      _
    $region3: #{tpu_custom_call.1} parent=1 // loop_header
      %s16 = sphi 0, %s20
      %p17 = scmp.ge.s32.totalorder %s16, 10
      %s26 = sphi 0, %s28
      %s29 = sphi 0, %s26
      %s30 = sphi 0, %s29
      %s46 = sphi 0, %s30
      %s50 = sphi 0, %s50
      %s52 = sphi 0, %s50
      %s53 = sphi 0, %s52
      %s67 = sphi 0, %s53
      %s71 = sphi 0, %s71
      %s73 = sphi 0, %s71
      %s74 = sphi 0, %s73
      %s88 = sphi 0, %s74
      %s94 = sphi 0, %s96
      %s97 = sphi 0, %s94
      %s98 = sphi 0, %s97
      %s114 = sphi 0, %s98
    $region4: #{tpu_custom_call.1} parent=1 // loop_header_branch
      %19 = sbr.rel (%p17) target = $region8
    $region5: #{tpu_custom_call.1} parent=1 // loop_body
      %s21 = ssub.s32 %s16, 1
      %s22 = ssub.s32 %s16, 2
      %s23 = sadd.s32 %s16, 1
      %s24 = ssub.s32 %s16, %s23
      %p25 = scmp.eq.s32.totalorder %s24, 0
      %s27 = sadd.s32 %s26, 1
      %s28 = scalar_select %p25, %s26, %s27
      %p31 = pneg %p25
      %p32 = scmp.eq.s32.totalorder %s16, 7
      %p33 = por %p31, %p32
      %p34 = scmp.ne.s32.totalorder %s26, %s29
      %p35 = scmp.eq.s32.totalorder %s16, 0
      %p36 = por %p34, %p35
      %p37 = scmp.ne.s32.totalorder %s26, %s29
      %p38 = scmp.eq.s32.totalorder %s21, 7
      %p39 = por %p37, %p38
      %p40 = scmp.ne.s32.totalorder %s29, %s30
      %p41 = scmp.eq.s32.totalorder %s21, 0
      %p42 = por %p40, %p41
      %p43 = scmp.ne.s32.totalorder %s29, %s30
      %p44 = scmp.eq.s32.totalorder %s22, 7
      %p45 = por %p43, %p44
      %p47 = scmp.ne.s32.totalorder %s30, %s46
      %p48 = scmp.eq.s32.totalorder %s22, 0
      %p49 = por %p47, %p48
      %s51 = sadd.s32 %s50, 1
      %p54 = scmp.eq.s32.totalorder %s16, 7
      %p55 = scmp.ne.s32.totalorder %s50, %s52
      %p56 = scmp.eq.s32.totalorder %s16, 0
      %p57 = por %p55, %p56
      %p58 = scmp.ne.s32.totalorder %s50, %s52
      %p59 = scmp.eq.s32.totalorder %s21, 7
      %p60 = por %p58, %p59
      %p61 = scmp.ne.s32.totalorder %s52, %s53
      %p62 = scmp.eq.s32.totalorder %s21, 0
      %p63 = por %p61, %p62
      %p64 = scmp.ne.s32.totalorder %s52, %s53
      %p65 = scmp.eq.s32.totalorder %s22, 7
      %p66 = por %p64, %p65
      %p68 = scmp.ne.s32.totalorder %s53, %s67
      %p69 = scmp.eq.s32.totalorder %s22, 0
      %p70 = por %p68, %p69
      %s72 = sadd.s32 %s71, 1
      %p75 = scmp.eq.s32.totalorder %s16, 7
      %p76 = scmp.ne.s32.totalorder %s71, %s73
      %p77 = scmp.eq.s32.totalorder %s16, 0
      %p78 = por %p76, %p77
      %p79 = scmp.ne.s32.totalorder %s71, %s73
      %p80 = scmp.eq.s32.totalorder %s21, 7
      %p81 = por %p79, %p80
      %p82 = scmp.ne.s32.totalorder %s73, %s74
      %p83 = scmp.eq.s32.totalorder %s21, 0
      %p84 = por %p82, %p83
      %p85 = scmp.ne.s32.totalorder %s73, %s74
      %p86 = scmp.eq.s32.totalorder %s22, 7
      %p87 = por %p85, %p86
      %p89 = scmp.ne.s32.totalorder %s74, %s88
      %p90 = scmp.eq.s32.totalorder %s22, 0
      %p91 = por %p89, %p90
      %s92 = ssub.s32 %s16, %s23
      %p93 = scmp.eq.s32.totalorder %s92, 0
      %s95 = sadd.s32 %s94, 1
      %s96 = scalar_select %p93, %s94, %s95
      %p99 = pneg %p93
      %p100 = scmp.eq.s32.totalorder %s16, 7
      %p101 = por %p99, %p100
      %p102 = scmp.ne.s32.totalorder %s94, %s97
      %p103 = scmp.eq.s32.totalorder %s16, 0
      %p104 = por %p102, %p103
      %p105 = scmp.ne.s32.totalorder %s94, %s97
      %p106 = scmp.eq.s32.totalorder %s21, 7
      %p107 = por %p105, %p106
      %p108 = scmp.ne.s32.totalorder %s97, %s98
      %p109 = scmp.eq.s32.totalorder %s21, 0
      %p110 = por %p108, %p109
      %p111 = scmp.ne.s32.totalorder %s97, %s98
      %p112 = scmp.eq.s32.totalorder %s22, 7
      %p113 = por %p111, %p112
      %p115 = scmp.ne.s32.totalorder %s98, %s114
      %p116 = scmp.eq.s32.totalorder %s22, 0
      %p117 = por %p115, %p116
      %p118 = scmp.le.s32.totalorder 1, %s16
      %p119 = scmp.lt.s32.totalorder %s16, 9
      %p120 = pnand %p118, %p119
      %p121 = pneg %p120
      // Predicated region
      $region9: #{tpu_custom_call.1} parent=5 // pred_check
        _
      $region10: #{tpu_custom_call.1} parent=5 // pred_check_branch
        %123 = sbr.rel (%p120) target = $region12
      $region11: #{tpu_custom_call.1} parent=5 // pred_region
        %s124 = ssub.s32 %s16, 1
        // Predicated region
        $region13: #{tpu_custom_call.1} parent=11 // pred_check
          %p125 = pneg %p63
        $region14: #{tpu_custom_call.1} parent=11 // pred_check_branch
          %127 = sbr.rel (%p125) target = $region16
        $region15: #{tpu_custom_call.1} parent=11 // pred_region
          %s129 = ssub.s32 128, 128
          %130 = vsyncadd [#allocation6], %s129
          %s131 = sshll.u32 [#allocation5], 4
          %s132 = int_to_ptr.vmem [resolvable:$true] %s131
          %137 = dma.hbm_to_vmem [thread:$0]  %s1, 128, %s132, [#allocation6], 64, 64, 4
        $region16: #{tpu_custom_call.1} parent=11 // pred_fallthru
          _
        // Predicated region
        $region17: #{tpu_custom_call.1} parent=11 // pred_check
          %p138 = pneg %p84
        $region18: #{tpu_custom_call.1} parent=11 // pred_check_branch
          %140 = sbr.rel (%p138) target = $region20
        $region19: #{tpu_custom_call.1} parent=11 // pred_region
          _
        $region20: #{tpu_custom_call.1} parent=11 // pred_fallthru
          _
      $region12: #{tpu_custom_call.1} parent=5 // pred_fallthru
        _
      %p141 = scmp.lt.s32.totalorder %s16, 8
      // Predicated region
      $region21: #{tpu_custom_call.1} parent=5 // pred_check
        %p142 = pneg %p141
      $region22: #{tpu_custom_call.1} parent=5 // pred_check_branch
        %144 = sbr.rel (%p142) target = $region24
      $region23: #{tpu_custom_call.1} parent=5 // pred_region
        // Predicated region
        $region25: #{tpu_custom_call.1} parent=23 // pred_check
          %p145 = pneg %p36
        $region26: #{tpu_custom_call.1} parent=23 // pred_check_branch
          %147 = sbr.rel (%p145) target = $region28
        $region27: #{tpu_custom_call.1} parent=23 // pred_region
          %s148 = sand.u32 %s26, 1
          %s149 = scalar_lea.sflag [#allocation3], %s148
          %s150 = sand.u32 %s26, 1
          %s151 = scalar_lea.vmem [#allocation2], %s150
          %s153 = ssub.s32 16, 16
          %154 = vsyncadd %s149, %s153
          %s155 = smul.addr %s16, 16
          %s156 = scalar_lea.hbm %s0, %s155
          %s158 = sshll.u32 %s151, 4
          %s159 = int_to_ptr.vmem [resolvable:$true] %s158
          %161 = dma.hbm_to_vmem [thread:$0]  %s156, 16, %s159, %s149
        $region28: #{tpu_custom_call.1} parent=23 // pred_fallthru
          _
      $region24: #{tpu_custom_call.1} parent=5 // pred_fallthru
        _
      %p162 = scmp.le.s32.totalorder 1, %s16
      %p163 = scmp.lt.s32.totalorder %s16, 9
      %p164 = pnand %p162, %p163
      %p165 = pneg %p164
      // Predicated region
      $region29: #{tpu_custom_call.1} parent=5 // pred_check
        _
      $region30: #{tpu_custom_call.1} parent=5 // pred_check_branch
        %167 = sbr.rel (%p164) target = $region32
      $region31: #{tpu_custom_call.1} parent=5 // pred_region
        %s168 = ssub.s32 %s16, 1
        %s169 = sand.u32 %s29, 1
        %s170 = scalar_lea.sflag [#allocation3], %s169
        %s171 = sand.u32 %s29, 1
        %s172 = scalar_lea.vmem [#allocation2], %s171
        // Predicated region
        $region33: #{tpu_custom_call.1} parent=31 // pred_check
          %p173 = pneg %p42
        $region34: #{tpu_custom_call.1} parent=31 // pred_check_branch
          %175 = sbr.rel (%p173) target = $region36
        $region35: #{tpu_custom_call.1} parent=31 // pred_region
          %176 = dma.done %s170, 16
        $region36: #{tpu_custom_call.1} parent=31 // pred_fallthru
          _
        // Predicated region
        $region37: #{tpu_custom_call.1} parent=31 // pred_check
          %p177 = pneg %p63
        $region38: #{tpu_custom_call.1} parent=31 // pred_check_branch
          %179 = sbr.rel (%p177) target = $region40
        $region39: #{tpu_custom_call.1} parent=31 // pred_region
          %180 = dma.done [#allocation6], 128
        $region40: #{tpu_custom_call.1} parent=31 // pred_fallthru
          _
        %s181 = sand.u32 %s29, 1
        %s182 = scalar_lea.sflag [#allocation3], %s181
        %s183 = sand.u32 %s29, 1
        %s184 = scalar_lea.vmem [#allocation2], %s183
        %p185 = pneg %p42
        %p186 = pneg %p39
        %p187 = pneg %p63
        %p188 = pneg %p60
        %p189 = pneg %p84
        %p190 = pneg %p81
        %p191 = pneg %p110
        %p192 = pneg %p107
        %s193 = sand.u32 %s97, 1
        %s194 = scalar_lea.sflag [#allocation4], %s193
        %s195 = sand.u32 %s97, 1
        %s196 = smul.addr %s195, 2
        %s197 = scalar_lea.vmem [#allocation7], %s196
        %v199 = vld [vmem:[%s172] sm:$0x1]
        %v200 = vld [vmem:[#allocation5] sm:$0xf]
        %v201 = vld [vmem:[#allocation5 + $0x4] sm:$0xf]
        %v202 = vld [vmem:[%s2] sm:$0x1]
        %v204 = vlaneseq
        %v205 = vshrl.u32 %v204, 7
        %v206 = vsub.s32 0, %v205
        %v207 = vrot.slane %v202, %v206
        %v211 = vunpack.c.l.b16 %v200
        %v212 = vunpack.c.l.b16 %v201
        %v213 = vpack.c.b16 %v212, %v211
        %vm215 = vcmask 130048
        %v217 = vsel %vm215, %v199, 0
        %219 = vmatprep.subr.bf16.mxu0 0
        %220 = vmatpush1.bf16.msra.mxu0 %v213
        %221 = vmatprep.subr.bf16.mxu0 0
        %222 = vmatpush1.bf16.msra.mxu0 0
        %223 = vmatprep.subr.bf16.mxu0 0
        %224 = vmatpush1.bf16.msra.mxu0 0
        %225 = vmatprep.subr.bf16.mxu0 0
        %226 = vmatpush1.bf16.msra.mxu0 0
        %227 = vmatprep.subr.bf16.mxu0 0
        %228 = vmatpush1.bf16.msra.mxu0 0
        %229 = vmatprep.subr.bf16.mxu0 0
        %230 = vmatpush1.bf16.msra.mxu0 0
        %231 = vmatprep.subr.bf16.mxu0 0
        %232 = vmatpush1.bf16.msra.mxu0 0
        %233 = vmatprep.subr.bf16.mxu0 0
        %234 = vmatpush1.bf16.msra.mxu0 0
        %235 = vmatprep.subr.bf16.mxu0 0
        %236 = vmatpush1.bf16.msra.mxu0 0
        %237 = vmatprep.subr.bf16.mxu0 0
        %238 = vmatpush1.bf16.msra.mxu0 0
        %239 = vmatprep.subr.bf16.mxu0 0
        %240 = vmatpush1.bf16.msra.mxu0 0
        %241 = vmatprep.subr.bf16.mxu0 0
        %242 = vmatpush1.bf16.msra.mxu0 0
        %243 = vmatprep.subr.bf16.mxu0 0
        %244 = vmatpush1.bf16.msra.mxu0 0
        %245 = vmatprep.subr.bf16.mxu0 0
        %246 = vmatpush1.bf16.msra.mxu0 0
        %247 = vmatprep.subr.bf16.mxu0 0
        %248 = vmatpush1.bf16.msra.mxu0 0
        %249 = vmatprep.subr.bf16.mxu0 0
        %250 = vmatpush1.bf16.msra.mxu0 0
        %251 = vmatprep.mubr.bf16.mxu0 0
        %252 = vmatmul.mubr.bf16.gmra.mrb[0].mxu0 %v217
        %v253 = vpop.f32.mrb[0].mxu0
        %v254 = vadd.f32 %v207, %v253
        %v255 = vpop.f32.mrb[0].mxu0
        %v256 = vpop.f32.mrb[0].mxu0
        %v257 = vpop.f32.mrb[0].mxu0
        %258 = vdwg.mxu0
        %259 = vst [vmem:[%s197] sm:$0x3] %v254
        %s260 = sand.u32 %s97, 1
        %s261 = scalar_lea.sflag [#allocation4], %s260
        %s262 = sand.u32 %s97, 1
        %s263 = smul.addr %s262, 2
        %s264 = scalar_lea.vmem [#allocation7], %s263
        // Predicated region
        $region41: #{tpu_custom_call.1} parent=31 // pred_check
          %p265 = pneg %p107
        $region42: #{tpu_custom_call.1} parent=31 // pred_check_branch
          %267 = sbr.rel (%p265) target = $region44
        $region43: #{tpu_custom_call.1} parent=31 // pred_region
          %s269 = ssub.s32 32, 32
          %270 = vsyncadd %s261, %s269
          %s271 = smul.addr %s21, 32
          %s272 = scalar_lea.hbm %s3, %s271
          %s274 = sshll.u32 %s264, 4
          %s275 = int_to_ptr.vmem [resolvable:$true] %s274
          %277 = dma.vmem_to_hbm [thread:$0]  %s275, 32, %s272, %s261
        $region44: #{tpu_custom_call.1} parent=31 // pred_fallthru
          _
      $region32: #{tpu_custom_call.1} parent=5 // pred_fallthru
        _
      %p278 = scmp.le.s32.totalorder 2, %s16
      // Predicated region
      $region45: #{tpu_custom_call.1} parent=5 // pred_check
        %p279 = pneg %p278
      $region46: #{tpu_custom_call.1} parent=5 // pred_check_branch
        %281 = sbr.rel (%p279) target = $region48
      $region47: #{tpu_custom_call.1} parent=5 // pred_region
        %s282 = ssub.s32 %s16, 2
        // Predicated region
        $region49: #{tpu_custom_call.1} parent=47 // pred_check
          %p283 = pneg %p113
        $region50: #{tpu_custom_call.1} parent=47 // pred_check_branch
          %285 = sbr.rel (%p283) target = $region52
        $region51: #{tpu_custom_call.1} parent=47 // pred_region
          %s286 = sand.u32 %s98, 1
          %s287 = scalar_lea.sflag [#allocation4], %s286
          %s288 = sand.u32 %s98, 1
          %s289 = smul.addr %s288, 2
          %s290 = scalar_lea.vmem [#allocation7], %s289
          %291 = dma.done %s287, 32
        $region52: #{tpu_custom_call.1} parent=47 // pred_fallthru
          _
      $region48: #{tpu_custom_call.1} parent=5 // pred_fallthru
        _
    $region6: #{tpu_custom_call.1} parent=1 // loop_footer
      %s20 = sadd.s32 1, %s16
    $region7: #{tpu_custom_call.1} parent=1 // loop_footer_branch
      %15 = sbr.rel target = $region3
    $region8: #{tpu_custom_call.1} parent=1 // loop_exit
      _
    %292 = vsyncpa [#allocation3], 1
    %s293 = scalar_lea.sflag [#allocation3], 1
    %294 = vsyncpa %s293, 1
    %295 = vsyncpa [#allocation6], 1
    %296 = vsyncpa [#allocation4], 1
    %s297 = scalar_lea.sflag [#allocation4], 1
    %298 = vsyncpa %s297, 1

</llo_original>
